<compile_context>
chip_gen: v7x
topology: tpu7x:2x2x1
jax: 0.10.0
libtpu: 0.0.40
codegen_flags: <defaults>
</compile_context>

<pallas_src>
import jax
import jax.numpy as jnp
from jax.experimental import pallas as pl
from jax.experimental.pallas import tpu as pltpu


def _normalize_kernel(x_ref, scale_ref, bias_ref, o_ref):
    # x_ref / o_ref : (rt, lt) tile of the flattened (N*C, H*W) tensor
    # scale_ref / bias_ref : (rt, 1) per-row parameters, lane-broadcast here.
    o_ref[...] = (x_ref[...] * scale_ref[...] + bias_ref[...]).astype(o_ref.dtype)


def _round_down(v, m):
    return (v // m) * m


def _tpu_budgets():
    """(per-tile byte budget, scoped VMEM limit) for the local TPU generation."""
    try:
        kind = jax.devices()[0].device_kind.lower()
    except Exception:
        kind = ""
    if "v7" in kind:
        # 64 MiB physical VMEM: 8 MiB tiles -> 2 in + 2 out bufs = 32 MiB.
        return 8 << 20, 48 << 20
    if "v6" in kind:
        return 8 << 20, 64 << 20
    if "v5 lite" in kind or "v5e" in kind or "v5lite" in kind:
        return 4 << 20, 32 << 20
    # Unknown / other generations: conservative, safe everywhere.
    return 4 << 20, 32 << 20


def _pick_tiles(rows, lanes, itemsize, budget):
    """Choose (rt, lt) so blocks are legal ((8,128)-aligned or full-extent),
    lane-dense, and each grid step moves close to `budget` bytes."""
    row_bytes = lanes * itemsize

    # Lane axis: prefer the full H*W row (no ragged j edge, scale/bias fetched
    # once per row tile). Fall back to 128-multiples only for huge rows.
    if row_bytes <= budget or lanes <= 128:
        lt = lanes
    else:
        lt = min(lanes, max(128, _round_down(budget // itemsize, 128)))

    # Row axis: as many rows as fit the budget, multiple of 8 (or full extent).
    per_row_tile = lt * itemsize
    max_rt = max(1, budget // per_row_tile)
    if rows <= max_rt:
        rt = rows                       # full extent -> always a legal block
    else:
        rt = min(rows, max(8, _round_down(max_rt, 8)))

    # Megacore (v7x has 2 TensorCores): if everything collapsed into a single
    # block, split the row axis so a "parallel" axis has >= 2 blocks to shard.
    if rt == rows and lt == lanes and rows >= 16:
        rt = max(8, _round_down(-(-rows // 2), 8))   # ~rows/2, multiple of 8

    return rt, lt


def normalize(x,
              mean=(0.485, 0.456, 0.406),
              std=(0.229, 0.224, 0.225)):
    """(x - mean[c]) / std[c] channel-wise over axis 1 of an NCHW tensor."""
    N, C, H, W = x.shape
    assert C == len(mean) == len(std)

    rows, lanes = N * C, H * W
    # TODO(synk): lanes < 128 works (full-extent block) but hits masked stores;
    # fold spatial dims differently if that case ever matters for performance.

    # Integer/uint8 images: compute and return float32 (PyTorch semantics of a
    # float normalize); float inputs keep their dtype.
    out_dtype = x.dtype if jnp.issubdtype(x.dtype, jnp.floating) else jnp.float32

    mean_arr = jnp.asarray(mean, dtype=jnp.float32)
    std_arr = jnp.asarray(std, dtype=jnp.float32)
    scale = 1.0 / std_arr                        # (C,)
    bias = -mean_arr * scale                     # (C,)  x*scale + bias == (x-mean)/std

    # Per-row (n, c) parameter columns aligned with the flattened row axis.
    scale_rows = jnp.tile(scale, N).reshape(rows, 1)
    bias_rows = jnp.tile(bias, N).reshape(rows, 1)

    # Free (metadata-only) reshape of a contiguous NCHW tensor.
    x2 = x.reshape(rows, lanes)
    if x2.dtype != out_dtype and not jnp.issubdtype(x.dtype, jnp.floating):
        x2 = x2.astype(out_dtype)

    itemsize = jnp.dtype(out_dtype).itemsize
    tile_budget, vmem_limit = _tpu_budgets()
    rt, lt = _pick_tiles(rows, lanes, itemsize, tile_budget)
    grid = (pl.cdiv(rows, rt), pl.cdiv(lanes, lt))

    total_elems = rows * lanes
    cost = pl.CostEstimate(
        flops=2 * total_elems,
        transcendentals=0,
        bytes_accessed=2 * total_elems * itemsize + 2 * rows * 4,
    )

    out2 = pl.pallas_call(
        _normalize_kernel,
        out_shape=jax.ShapeDtypeStruct((rows, lanes), out_dtype),
        grid=grid,
        in_specs=[
            pl.BlockSpec((rt, lt), lambda i, j: (i, j)),   # x tile
            pl.BlockSpec((rt, 1), lambda i, j: (i, 0)),    # per-row scale
            pl.BlockSpec((rt, 1), lambda i, j: (i, 0)),    # per-row bias
        ],
        out_specs=pl.BlockSpec((rt, lt), lambda i, j: (i, j)),
        compiler_params=pltpu.CompilerParams(
            dimension_semantics=("parallel", "parallel"),
            vmem_limit_bytes=vmem_limit,
        ),
        cost_estimate=cost,
    )(x2, scale_rows, bias_rows)

    return out2.reshape(N, C, H, W)


def _reference(x, mean, std):
    C = x.shape[1]
    m = jnp.asarray(mean, jnp.float32).reshape(1, C, 1, 1)
    s = jnp.asarray(std, jnp.float32).reshape(1, C, 1, 1)
    return (x - m) / s


if __name__ == "__main__":
    key = jax.random.PRNGKey(0)
    mean = (0.485, 0.456, 0.406)
    std = (0.229, 0.224, 0.225)

    # Small ImageNet-style input (3 RGB channels).
    N, C, H, W = 2, 3, 16, 16
    x = jax.random.uniform(key, (N, C, H, W), dtype=jnp.float32)
    out = jax.block_until_ready(normalize(x, mean, std))
    ref = _reference(x, mean, std)
    assert jnp.allclose(out, ref, atol=1e-5, rtol=1e-5), "mismatch vs reference"

    # Second shape whose H*W (576) is not a multiple of 128: exercises the
    # full-extent (masked) lane block path for correctness.
    key2 = jax.random.PRNGKey(0)
    x2 = jax.random.uniform(key2, (2, 3, 24, 24), dtype=jnp.float32)
    out2 = jax.block_until_ready(normalize(x2, mean, std))
    ref2 = _reference(x2, mean, std)
    assert jnp.allclose(out2, ref2, atol=1e-5, rtol=1e-5), "mismatch vs reference (24x24)"

    print("KERNEL_OK")
</pallas_src>

<mosaic_0001>
module attributes {stable_mosaic.version = 11 : i64} {
  func.func @_normalize_kernel(%arg0: i32, %arg1: i32, %arg2: memref<6x256xf32, #tpu.memory_space<vmem>>, %arg3: memref<6x1xf32, #tpu.memory_space<vmem>>, %arg4: memref<6x1xf32, #tpu.memory_space<vmem>>, %arg5: memref<6x256xf32, #tpu.memory_space<vmem>>) attributes {dimension_semantics = [#tpu.dimension_semantics<parallel>, #tpu.dimension_semantics<parallel>], iteration_bounds = array<i64: 1, 1>, scalar_prefetch = 0 : i64, scratch_operands = 0 : i64, tpu.core_type = #tpu.core_type<tc>, window_params = [{transform_indices = @transform_0, window_bounds = array<i64: 6, 256>}, {transform_indices = @transform_1, window_bounds = array<i64: 6, 1>}, {transform_indices = @transform_2, window_bounds = array<i64: 6, 1>}, {transform_indices = @transform_3, window_bounds = array<i64: 6, 256>}]} {
    %c0 = arith.constant 0 : index
    %c0_0 = arith.constant 0 : index
    %0 = vector.load %arg2[%c0, %c0_0] : memref<6x256xf32, #tpu.memory_space<vmem>>, vector<6x256xf32>
    %c0_1 = arith.constant 0 : index
    %c0_2 = arith.constant 0 : index
    %1 = vector.load %arg3[%c0_1, %c0_2] : memref<6x1xf32, #tpu.memory_space<vmem>>, vector<6x1xf32>
    %2 = vector.broadcast %1 : vector<6x1xf32> to vector<6x256xf32>
    %3 = arith.mulf %0, %2 : vector<6x256xf32>
    %c0_3 = arith.constant 0 : index
    %c0_4 = arith.constant 0 : index
    %4 = vector.load %arg4[%c0_3, %c0_4] : memref<6x1xf32, #tpu.memory_space<vmem>>, vector<6x1xf32>
    %5 = vector.broadcast %4 : vector<6x1xf32> to vector<6x256xf32>
    %6 = arith.addf %3, %5 : vector<6x256xf32>
    %c0_5 = arith.constant 0 : index
    %c0_6 = arith.constant 0 : index
    %7 = vector.load %arg5[%c0_5, %c0_6] : memref<6x256xf32, #tpu.memory_space<vmem>>, vector<6x256xf32>
    tpu.vector_store %arg5[%c0_5, %c0_6], %6 {strides = array<i32>} : memref<6x256xf32, #tpu.memory_space<vmem>>, vector<6x256xf32>,
    return
  }
  func.func @transform_0(%arg0: i32, %arg1: i32) -> (i32, i32) {
    %c0_i32 = arith.constant 0 : i32
    return %arg0, %arg1 : i32, i32
  }
  func.func @transform_1(%arg0: i32, %arg1: i32) -> (i32, i32) {
    %c0_i32 = arith.constant 0 : i32
    %c0_i32_0 = arith.constant 0 : i32
    return %arg0, %c0_i32 : i32, i32
  }
  func.func @transform_2(%arg0: i32, %arg1: i32) -> (i32, i32) {
    %c0_i32 = arith.constant 0 : i32
    %c0_i32_0 = arith.constant 0 : i32
    return %arg0, %c0_i32 : i32, i32
  }
  func.func @transform_3(%arg0: i32, %arg1: i32) -> (i32, i32) {
    %c0_i32 = arith.constant 0 : i32
    return %arg0, %arg1 : i32, i32
  }
}

</mosaic_0001>

<llo_original>
// kernel: tpu_custom_call.1
$region0: #{tpu_custom_call.1}
  #allocation0 [shape = 'u32[]', space=smem, size = 0x4, offset = 0x4, fixed_abs, tag = 'smem constant byte address 0x4 - core index']
  #allocation1 [shape = 'u32[144,128]{1,0:T(1,128)}', space=vmem, size = 0x12000, scoped, tag = 'internal scratch']
  %s0 = inlined_call_operand.vmem [shape: f32[6,256], index: 0, kind: input, shape index: {}]
  %s1 = inlined_call_operand.vmem [shape: f32[6,1], index: 1, kind: input, shape index: {}]
  %s2 = inlined_call_operand.vmem [shape: f32[6,1], index: 2, kind: input, shape index: {}]
  %s3 = inlined_call_operand.hbm [shape: f32[6,256], index: 3, kind: output, shape index: {}]
  %s4 = sld [smem:[#allocation0]]
  $region22: #{tpu_custom_call.1} parent=0
    _
  %s6 = ssub.s32 1, %s4
  %s7 = scalar_select 0, %s6, %s4
  $region1: #{tpu_custom_call.1} parent=0
    #allocation2 [shape = 'u8[8192]{0}', space=vmem, size = 0x2000, scoped, tag = 'output window, operand 0, single buffered']
    #allocation3 [shape = 's32[1]{0}', space=sflag, size = 0x4, scoped, tag = 'scoped memory for tpu_custom_call.1']
    %8 = vsyncpa [#allocation3], 0
    // Predicated region
    $region2: #{tpu_custom_call.1} parent=1 // pred_check
      _
    $region3: #{tpu_custom_call.1} parent=1 // pred_check_branch
      %10 = sbr.rel (0) target = $region5
    $region4: #{tpu_custom_call.1} parent=1 // pred_region
      _
    $region5: #{tpu_custom_call.1} parent=1 // pred_fallthru
      _
    // Predicated region
    $region6: #{tpu_custom_call.1} parent=1 // pred_check
      _
    $region7: #{tpu_custom_call.1} parent=1 // pred_check_branch
      %12 = sbr.rel (0) target = $region9
    $region8: #{tpu_custom_call.1} parent=1 // pred_region
      _
    $region9: #{tpu_custom_call.1} parent=1 // pred_fallthru
      _
    // Predicated region
    $region10: #{tpu_custom_call.1} parent=1 // pred_check
      _
    $region11: #{tpu_custom_call.1} parent=1 // pred_check_branch
      %14 = sbr.rel (0) target = $region13
    $region12: #{tpu_custom_call.1} parent=1 // pred_region
      _
    $region13: #{tpu_custom_call.1} parent=1 // pred_fallthru
      _
    %v15 = vld [vmem:[%s0] sm:$0x3f]
    %v16 = vld [vmem:[%s0 + $0x8] sm:$0x3f]
    %v17 = vld [vmem:[%s1] sm:$0x3f]
    %19 = vset.pattern.permute.xlu0 0
    %20 = vperm.xlu0 %19, %v17
    %v21 = vpop.permute.xlu0 %20
    %v23 = vmul.f32 %v15, %v21
    %v24 = vmul.f32 %v16, %v21
    %v25 = vld [vmem:[%s2] sm:$0x3f]
    %27 = vset.pattern.permute.xlu0 0
    %28 = vperm.xlu0 %27, %v25
    %v29 = vpop.permute.xlu0 %28
    %v31 = vadd.f32 %v23, %v29
    %v32 = vadd.f32 %v24, %v29
    %33 = vst [vmem:[#allocation2] sm:$0x3f] %v31
    %34 = vst [vmem:[#allocation2 + $0x8] sm:$0x3f] %v32
    // Predicated region
    $region14: #{tpu_custom_call.1} parent=1 // pred_check
      _
    $region15: #{tpu_custom_call.1} parent=1 // pred_check_branch
      %36 = sbr.rel (0) target = $region17
    $region16: #{tpu_custom_call.1} parent=1 // pred_region
      %s38 = ssub.s32 256, 256
      %39 = vsyncadd [#allocation3], %s38
      %s41 = sshll.u32 [#allocation2], 4
      %s42 = int_to_ptr.vmem [resolvable:$true] %s41
      %44 = dma.vmem_to_hbm [thread:$0]  %s42, 256, %s3, [#allocation3]
    $region17: #{tpu_custom_call.1} parent=1 // pred_fallthru
      _
    // Predicated region
    $region18: #{tpu_custom_call.1} parent=1 // pred_check
      _
    $region19: #{tpu_custom_call.1} parent=1 // pred_check_branch
      %46 = sbr.rel (0) target = $region21
    $region20: #{tpu_custom_call.1} parent=1 // pred_region
      %47 = dma.done [#allocation3], 256
    $region21: #{tpu_custom_call.1} parent=1 // pred_fallthru
      _
    %48 = vsyncpa [#allocation3], 1

</llo_original>
